<compile_context>
chip_gen: v7x
topology: tpu7x:2x2x1
jax: 0.10.0
libtpu: 0.0.40
codegen_flags: <defaults>
</compile_context>

<pallas_src>
import jax
import jax.numpy as jnp
from jax.experimental import pallas as pl
from jax.experimental.pallas import tpu as pltpu


def _pointwise_bn_hswish_kernel(x_ref, w_ref, shift_ref, o_ref):
    # x_ref:     (1, C_in,  TS)   one batch image, spatial tile on lanes
    # w_ref:     (C_out, C_in)    scale-folded 1x1 conv weight
    # shift_ref: (C_out, 1)       folded shift = (conv_bias - mean) * scale + beta
    # o_ref:     (1, C_out, TS)   lane-dense output tile
    c_in = x_ref.shape[1]

    x = x_ref[0].astype(jnp.float32)        # (C_in, TS)
    w = w_ref[...].astype(jnp.float32)      # (C_out, C_in)
    y = shift_ref[...]                      # (C_out, 1) f32, broadcasts over lanes

    # VPU broadcast-FMA over the tiny input-channel axis (unrolled at trace
    # time): (C_out,1) * (1,TS) -> (C_out,TS).  Avoids MXU push/pop latency.
    for ci in range(c_in):
        y = y + w[:, ci:ci + 1] * x[ci:ci + 1, :]

    # HardSwish(y) = y * relu6(y + 3) / 6
    y = y * jnp.clip(y + 3.0, 0.0, 6.0) * (1.0 / 6.0)

    o_ref[0] = y.astype(o_ref.dtype)


def depthwise_separable_block_forward(x_nchw, w_pw, b_pw, gamma, beta, mean, var,
                                      *, eps=1e-5, spatial_tile=2048, io_dtype=None):
    """x_nchw: (N, C_in, H, W).  Returns (N, C_out, H, W) in io_dtype (default: x dtype)."""
    N, C_in, H, W = x_nchw.shape
    C_out = w_pw.shape[1]
    HW = H * W
    io_dtype = x_nchw.dtype if io_dtype is None else io_dtype

    # NCHW -> (N, C_in, H*W): pure metadata reshape, no HBM transpose pass.
    x3d = x_nchw.reshape(N, C_in, HW).astype(io_dtype)

    # Fold conv bias + inference BatchNorm into the weight and a per-channel shift:
    #   y = (x @ W + b - mean) * s + beta,  s = gamma / sqrt(var + eps)
    #     = x @ (W * s)  +  ((b - mean) * s + beta)
    scale = (gamma / jnp.sqrt(var + eps)).astype(jnp.float32)          # (C_out,)
    w_folded = (w_pw.astype(jnp.float32) * scale[None, :]).T           # (C_out, C_in)
    shift = ((b_pw - mean) * scale + beta).reshape(C_out, 1)           # (C_out, 1)
    shift = shift.astype(jnp.float32)

    # Spatial tile: whole H*W if it fits (full-dim exception to (8,128) rule),
    # otherwise the largest multiple of 128 <= spatial_tile (lane-dense blocks).
    if HW <= spatial_tile:
        ts = HW
    else:
        ts = max(128, (spatial_tile // 128) * 128)
    n_s = pl.cdiv(HW, ts)  # tail block (if any) is masked by Pallas on store

    # Keep the grid splittable across v7x's two TensorCores when possible.
    if N == 1 and n_s == 1 and HW >= 256:
        ts = max(128, ((HW // 2) // 128) * 128)
        n_s = pl.cdiv(HW, ts)

    out3d = pl.pallas_call(
        _pointwise_bn_hswish_kernel,
        out_shape=jax.ShapeDtypeStruct((N, C_out, HW), io_dtype),
        grid_spec=pltpu.PrefetchScalarGridSpec(
            num_scalar_prefetch=0,
            grid=(N, n_s),
            in_specs=[
                pl.BlockSpec((1, C_in, ts), lambda n, s: (n, 0, s)),
                pl.BlockSpec((C_out, C_in), lambda n, s: (0, 0)),   # resident
                pl.BlockSpec((C_out, 1), lambda n, s: (0, 0)),      # resident
            ],
            out_specs=pl.BlockSpec((1, C_out, ts), lambda n, s: (n, 0, s)),
        ),
        compiler_params=pltpu.CompilerParams(
            dimension_semantics=("parallel", "parallel"),
            # Double-buffered (x + out) tiles at the default spatial_tile stay
            # in the hundreds of KiB; 32 MiB is safe on every generation and
            # well under v7x's 64 MiB physical VMEM.
            vmem_limit_bytes=32 * 1024 * 1024,
        ),
    )(x3d, w_folded.astype(io_dtype), shift)

    # (N, C_out, H*W) -> NCHW: free reshape, still no transpose.
    return out3d.reshape(N, C_out, H, W)


def _reference_forward(x_nchw, w_pw, b_pw, gamma, beta, mean, var, eps=1e-5):
    # Plain-JAX reference of the same semantics (1x1 conv + eval BN + HardSwish).
    N, C_in, H, W = x_nchw.shape
    x2d = jnp.transpose(x_nchw, (0, 2, 3, 1)).reshape(-1, C_in)
    z = x2d @ w_pw + b_pw
    z = (z - mean) / jnp.sqrt(var + eps) * gamma + beta
    z = z * jnp.clip(z + 3.0, 0.0, 6.0) / 6.0
    return jnp.transpose(z.reshape(N, H, W, -1), (0, 3, 1, 2))


if __name__ == "__main__":
    # Small shapes consistent with the module: batch=2, input_feature=4,
    # output_feature=8 (alpha=1), spatial=16x16.
    N, C_in, C_out, H, W = 2, 4, 8, 16, 16

    key = jax.random.PRNGKey(0)
    kx, kw, kb, kg, kbe, km, kv = jax.random.split(key, 7)

    x = jax.random.normal(kx, (N, C_in, H, W), dtype=jnp.float32)

    # Pointwise (1x1) conv params. PyTorch weight is (C_out, C_in, 1, 1);
    # we store it directly as the (C_in, C_out) matmul matrix.
    w_pw = jax.random.normal(kw, (C_in, C_out), dtype=jnp.float32) * 0.1
    b_pw = jax.random.normal(kb, (C_out,), dtype=jnp.float32) * 0.1

    # BatchNorm2d params (inference mode), deterministic but non-trivial.
    gamma = 1.0 + 0.1 * jax.random.normal(kg, (C_out,), dtype=jnp.float32)
    beta = 0.1 * jax.random.normal(kbe, (C_out,), dtype=jnp.float32)
    mean = 0.1 * jax.random.normal(km, (C_out,), dtype=jnp.float32)
    var = jnp.abs(1.0 + 0.1 * jax.random.normal(kv, (C_out,), dtype=jnp.float32))

    # NOTE: the depthwise conv / SE parameters of the module are never reflected
    # in the output (the reference forward overwrites `out` with pointhwise(x)),
    # so they are intentionally not materialized here.

    ref = _reference_forward(x, w_pw, b_pw, gamma, beta, mean, var)

    # f32 I/O path (exact check).
    out = depthwise_separable_block_forward(x, w_pw, b_pw, gamma, beta, mean, var)
    out = jax.block_until_ready(out)
    assert out.shape == (N, C_out, H, W)
    assert jnp.allclose(out, ref, atol=1e-5, rtol=1e-5)

    # bf16 HBM<->VMEM path (halves memory traffic on v6e/v7x); compute stays f32.
    out_bf16 = depthwise_separable_block_forward(
        x, w_pw, b_pw, gamma, beta, mean, var, io_dtype=jnp.bfloat16)
    out_bf16 = jax.block_until_ready(out_bf16)
    assert jnp.allclose(out_bf16.astype(jnp.float32), ref, atol=5e-2, rtol=5e-2)

    print("KERNEL_OK")
</pallas_src>

<mosaic_0001>
module attributes {stable_mosaic.version = 11 : i64} {
  func.func @_pointwise_bn_hswish_kernel(%arg0: i32, %arg1: i32, %arg2: memref<1x4x256xf32, #tpu.memory_space<vmem>>, %arg3: memref<8x4xf32, #tpu.memory_space<vmem>>, %arg4: memref<8x1xf32, #tpu.memory_space<vmem>>, %arg5: memref<1x8x256xf32, #tpu.memory_space<vmem>>) attributes {dimension_semantics = [#tpu.dimension_semantics<parallel>, #tpu.dimension_semantics<parallel>], iteration_bounds = array<i64: 2, 1>, scalar_prefetch = 0 : i64, scratch_operands = 0 : i64, tpu.core_type = #tpu.core_type<tc>, window_params = [{transform_indices = @transform_0, window_bounds = array<i64: 1, 4, 256>}, {pipeline_mode = #tpu.pipeline_mode<synchronous>, transform_indices = @transform_1, window_bounds = array<i64: 8, 4>}, {pipeline_mode = #tpu.pipeline_mode<synchronous>, transform_indices = @transform_2, window_bounds = array<i64: 8, 1>}, {transform_indices = @transform_3, window_bounds = array<i64: 1, 8, 256>}]} {
    %c0 = arith.constant 0 : index
    %c0_0 = arith.constant 0 : index
    %c0_1 = arith.constant 0 : index
    %0 = vector.load %arg2[%c0, %c0_0, %c0_1] : memref<1x4x256xf32, #tpu.memory_space<vmem>>, vector<1x4x256xf32>
    %1 = vector.shape_cast %0 : vector<1x4x256xf32> to vector<4x256xf32>
    %c0_2 = arith.constant 0 : index
    %c0_3 = arith.constant 0 : index
    %2 = vector.load %arg3[%c0_2, %c0_3] : memref<8x4xf32, #tpu.memory_space<vmem>>, vector<8x4xf32>
    %c0_4 = arith.constant 0 : index
    %c0_5 = arith.constant 0 : index
    %3 = vector.load %arg4[%c0_4, %c0_5] : memref<8x1xf32, #tpu.memory_space<vmem>>, vector<8x1xf32>
    %4 = vector.extract_strided_slice %2 {offsets = [0, 0], sizes = [8, 1], strides = [1, 1]} : vector<8x4xf32> to vector<8x1xf32>
    %5 = vector.extract_strided_slice %1 {offsets = [0, 0], sizes = [1, 256], strides = [1, 1]} : vector<4x256xf32> to vector<1x256xf32>
    %6 = vector.broadcast %4 : vector<8x1xf32> to vector<8x256xf32>
    %7 = vector.broadcast %5 : vector<1x256xf32> to vector<8x256xf32>
    %8 = arith.mulf %6, %7 : vector<8x256xf32>
    %9 = vector.broadcast %3 : vector<8x1xf32> to vector<8x256xf32>
    %10 = arith.addf %9, %8 : vector<8x256xf32>
    %11 = vector.extract_strided_slice %2 {offsets = [0, 1], sizes = [8, 1], strides = [1, 1]} : vector<8x4xf32> to vector<8x1xf32>
    %12 = vector.extract_strided_slice %1 {offsets = [1, 0], sizes = [1, 256], strides = [1, 1]} : vector<4x256xf32> to vector<1x256xf32>
    %13 = vector.broadcast %11 : vector<8x1xf32> to vector<8x256xf32>
    %14 = vector.broadcast %12 : vector<1x256xf32> to vector<8x256xf32>
    %15 = arith.mulf %13, %14 : vector<8x256xf32>
    %16 = arith.addf %10, %15 : vector<8x256xf32>
    %17 = vector.extract_strided_slice %2 {offsets = [0, 2], sizes = [8, 1], strides = [1, 1]} : vector<8x4xf32> to vector<8x1xf32>
    %18 = vector.extract_strided_slice %1 {offsets = [2, 0], sizes = [1, 256], strides = [1, 1]} : vector<4x256xf32> to vector<1x256xf32>
    %19 = vector.broadcast %17 : vector<8x1xf32> to vector<8x256xf32>
    %20 = vector.broadcast %18 : vector<1x256xf32> to vector<8x256xf32>
    %21 = arith.mulf %19, %20 : vector<8x256xf32>
    %22 = arith.addf %16, %21 : vector<8x256xf32>
    %23 = vector.extract_strided_slice %2 {offsets = [0, 3], sizes = [8, 1], strides = [1, 1]} : vector<8x4xf32> to vector<8x1xf32>
    %24 = vector.extract_strided_slice %1 {offsets = [3, 0], sizes = [1, 256], strides = [1, 1]} : vector<4x256xf32> to vector<1x256xf32>
    %25 = vector.broadcast %23 : vector<8x1xf32> to vector<8x256xf32>
    %26 = vector.broadcast %24 : vector<1x256xf32> to vector<8x256xf32>
    %27 = arith.mulf %25, %26 : vector<8x256xf32>
    %28 = arith.addf %22, %27 : vector<8x256xf32>
    %cst = arith.constant 3.000000e+00 : f32
    %29 = vector.broadcast %cst : f32 to vector<8x256xf32>
    %30 = arith.addf %28, %29 : vector<8x256xf32>
    %cst_6 = arith.constant 0.000000e+00 : f32
    %cst_7 = arith.constant 6.000000e+00 : f32
    %31 = vector.broadcast %cst_6 : f32 to vector<8x256xf32>
    %32 = arith.maximumf %31, %30 : vector<8x256xf32>
    %33 = vector.broadcast %cst_7 : f32 to vector<8x256xf32>
    %34 = arith.minimumf %33, %32 : vector<8x256xf32>
    %35 = arith.mulf %28, %34 : vector<8x256xf32>
    %cst_8 = arith.constant 0.166666672 : f32
    %36 = vector.broadcast %cst_8 : f32 to vector<8x256xf32>
    %37 = arith.mulf %35, %36 : vector<8x256xf32>
    %c0_9 = arith.constant 0 : index
    %c0_10 = arith.constant 0 : index
    %c0_11 = arith.constant 0 : index
    %38 = vector.load %arg5[%c0_9, %c0_10, %c0_11] : memref<1x8x256xf32, #tpu.memory_space<vmem>>, vector<1x8x256xf32>
    %39 = vector.shape_cast %38 : vector<1x8x256xf32> to vector<8x256xf32>
    %40 = vector.shape_cast %37 : vector<8x256xf32> to vector<1x8x256xf32>
    tpu.vector_store %arg5[%c0_9, %c0_10, %c0_11], %40 {strides = array<i32>} : memref<1x8x256xf32, #tpu.memory_space<vmem>>, vector<1x8x256xf32>,
    return
  }
  func.func @transform_0(%arg0: i32, %arg1: i32) -> (i32, i32, i32) {
    %c0_i32 = arith.constant 0 : i32
    %c0_i32_0 = arith.constant 0 : i32
    return %arg0, %c0_i32, %arg1 : i32, i32, i32
  }
  func.func @transform_1(%arg0: i32, %arg1: i32) -> (i32, i32) {
    %c0_i32 = arith.constant 0 : i32
    %c0_i32_0 = arith.constant 0 : i32
    %c0_i32_1 = arith.constant 0 : i32
    return %c0_i32, %c0_i32_0 : i32, i32
  }
  func.func @transform_2(%arg0: i32, %arg1: i32) -> (i32, i32) {
    %c0_i32 = arith.constant 0 : i32
    %c0_i32_0 = arith.constant 0 : i32
    %c0_i32_1 = arith.constant 0 : i32
    return %c0_i32, %c0_i32_0 : i32, i32
  }
  func.func @transform_3(%arg0: i32, %arg1: i32) -> (i32, i32, i32) {
    %c0_i32 = arith.constant 0 : i32
    %c0_i32_0 = arith.constant 0 : i32
    return %arg0, %c0_i32, %arg1 : i32, i32, i32
  }
}

</mosaic_0001>

<llo_original>
// kernel: tpu_custom_call.1
$region0: #{tpu_custom_call.1}
  #allocation0 [shape = 'u32[]', space=smem, size = 0x4, offset = 0x4, fixed_abs, tag = 'smem constant byte address 0x4 - core index']
  #allocation1 [shape = 'u32[144,128]{1,0:T(1,128)}', space=vmem, size = 0x12000, scoped, tag = 'internal scratch']
  %s0 = inlined_call_operand.vmem [shape: f32[2,4,256], index: 0, kind: input, shape index: {}]
  %s1 = inlined_call_operand.vmem [shape: f32[8,4], index: 1, kind: input, shape index: {}]
  %s2 = inlined_call_operand.vmem [shape: f32[8,1], index: 2, kind: input, shape index: {}]
  %s3 = inlined_call_operand.hbm [shape: f32[2,8,256], index: 3, kind: output, shape index: {}]
  %s4 = sld [smem:[#allocation0]]
  $region45: #{tpu_custom_call.1} parent=0
    _
  %s6 = ssub.s32 1, %s4
  %s7 = scalar_select 0, %s6, %s4
  $region1: #{tpu_custom_call.1} parent=0
    #allocation2 [shape = 'u8[16384]{0}', space=vmem, size = 0x4000, scoped, tag = 'output window, operand 0']
    #allocation3 [shape = 's32[2]{0}', space=sflag, size = 0x8, scoped, tag = 'scoped memory for tpu_custom_call.1']
    %8 = vsyncpa [#allocation3], 0
    %s9 = scalar_lea.sflag [#allocation3], 1
    %10 = vsyncpa %s9, 0
    loop: start=0, step=1, limit=4
    $region2: #{tpu_custom_call.1} parent=1 // loop_pre_header
      _
    $region3: #{tpu_custom_call.1} parent=1 // loop_header
      %s12 = sphi 0, %s16
      %p13 = scmp.ge.s32.totalorder %s12, 4
      %s19 = sphi 0, %s31
      %s20 = sphi 0, %s27
      %s21 = sphi 0, %s19
      %s22 = sphi 0, %s20
      %s23 = sphi 0, %s21
      %s24 = sphi 0, %s22
      %s36 = sphi 0, %s38
      %s39 = sphi 0, %s36
      %s40 = sphi 0, %s39
      %s56 = sphi 0, %s40
      %s60 = sphi 0, %s60
      %s62 = sphi 0, %s60
      %s63 = sphi 0, %s62
      %s77 = sphi 0, %s63
      %s81 = sphi 0, %s81
      %s83 = sphi 0, %s81
      %s84 = sphi 0, %s83
      %s98 = sphi 0, %s84
      %s106 = sphi 0, %s108
      %s109 = sphi 0, %s106
      %s110 = sphi 0, %s109
      %s126 = sphi 0, %s110
    $region4: #{tpu_custom_call.1} parent=1 // loop_header_branch
      %15 = sbr.rel (%p13) target = $region8
    $region5: #{tpu_custom_call.1} parent=1 // loop_body
      %s17 = ssub.s32 %s12, 1
      %s18 = ssub.s32 %s12, 2
      %s25 = sadd.s32 1, %s20
      %p26 = scmp.ge.s32.totalorder %s25, 1
      %s27 = scalar_select %p26, 0, %s25
      %s28 = sadd.s32 1, %s19
      %s29 = scalar_select %p26, %s28, %s19
      %p30 = scmp.ge.s32.totalorder %s29, 2
      %s31 = scalar_select %p30, 0, %s29
      %s32 = ssub.s32 %s19, %s31
      %s33 = ssub.s32 %s20, %s27
      %s34 = sor.u32 %s32, %s33
      %p35 = scmp.eq.s32.totalorder %s34, 0
      %s37 = sadd.s32 %s36, 1
      %s38 = scalar_select %p35, %s36, %s37
      %p41 = pneg %p35
      %p42 = scmp.eq.s32.totalorder %s12, 1
      %p43 = por %p41, %p42
      %p44 = scmp.ne.s32.totalorder %s36, %s39
      %p45 = scmp.eq.s32.totalorder %s12, 0
      %p46 = por %p44, %p45
      %p47 = scmp.ne.s32.totalorder %s36, %s39
      %p48 = scmp.eq.s32.totalorder %s17, 1
      %p49 = por %p47, %p48
      %p50 = scmp.ne.s32.totalorder %s39, %s40
      %p51 = scmp.eq.s32.totalorder %s17, 0
      %p52 = por %p50, %p51
      %p53 = scmp.ne.s32.totalorder %s39, %s40
      %p54 = scmp.eq.s32.totalorder %s18, 1
      %p55 = por %p53, %p54
      %p57 = scmp.ne.s32.totalorder %s40, %s56
      %p58 = scmp.eq.s32.totalorder %s18, 0
      %p59 = por %p57, %p58
      %s61 = sadd.s32 %s60, 1
      %p64 = scmp.eq.s32.totalorder %s12, 1
      %p65 = scmp.ne.s32.totalorder %s60, %s62
      %p66 = scmp.eq.s32.totalorder %s12, 0
      %p67 = por %p65, %p66
      %p68 = scmp.ne.s32.totalorder %s60, %s62
      %p69 = scmp.eq.s32.totalorder %s17, 1
      %p70 = por %p68, %p69
      %p71 = scmp.ne.s32.totalorder %s62, %s63
      %p72 = scmp.eq.s32.totalorder %s17, 0
      %p73 = por %p71, %p72
      %p74 = scmp.ne.s32.totalorder %s62, %s63
      %p75 = scmp.eq.s32.totalorder %s18, 1
      %p76 = por %p74, %p75
      %p78 = scmp.ne.s32.totalorder %s63, %s77
      %p79 = scmp.eq.s32.totalorder %s18, 0
      %p80 = por %p78, %p79
      %s82 = sadd.s32 %s81, 1
      %p85 = scmp.eq.s32.totalorder %s12, 1
      %p86 = scmp.ne.s32.totalorder %s81, %s83
      %p87 = scmp.eq.s32.totalorder %s12, 0
      %p88 = por %p86, %p87
      %p89 = scmp.ne.s32.totalorder %s81, %s83
      %p90 = scmp.eq.s32.totalorder %s17, 1
      %p91 = por %p89, %p90
      %p92 = scmp.ne.s32.totalorder %s83, %s84
      %p93 = scmp.eq.s32.totalorder %s17, 0
      %p94 = por %p92, %p93
      %p95 = scmp.ne.s32.totalorder %s83, %s84
      %p96 = scmp.eq.s32.totalorder %s18, 1
      %p97 = por %p95, %p96
      %p99 = scmp.ne.s32.totalorder %s84, %s98
      %p100 = scmp.eq.s32.totalorder %s18, 0
      %p101 = por %p99, %p100
      %s102 = ssub.s32 %s19, %s31
      %s103 = ssub.s32 %s20, %s27
      %s104 = sor.u32 %s102, %s103
      %p105 = scmp.eq.s32.totalorder %s104, 0
      %s107 = sadd.s32 %s106, 1
      %s108 = scalar_select %p105, %s106, %s107
      %p111 = pneg %p105
      %p112 = scmp.eq.s32.totalorder %s12, 1
      %p113 = por %p111, %p112
      %p114 = scmp.ne.s32.totalorder %s106, %s109
      %p115 = scmp.eq.s32.totalorder %s12, 0
      %p116 = por %p114, %p115
      %p117 = scmp.ne.s32.totalorder %s106, %s109
      %p118 = scmp.eq.s32.totalorder %s17, 1
      %p119 = por %p117, %p118
      %p120 = scmp.ne.s32.totalorder %s109, %s110
      %p121 = scmp.eq.s32.totalorder %s17, 0
      %p122 = por %p120, %p121
      %p123 = scmp.ne.s32.totalorder %s109, %s110
      %p124 = scmp.eq.s32.totalorder %s18, 1
      %p125 = por %p123, %p124
      %p127 = scmp.ne.s32.totalorder %s110, %s126
      %p128 = scmp.eq.s32.totalorder %s18, 0
      %p129 = por %p127, %p128
      %p130 = scmp.le.s32.totalorder 1, %s12
      %p131 = scmp.lt.s32.totalorder %s12, 3
      %p132 = pnand %p130, %p131
      %p133 = pneg %p132
      // Predicated region
      $region9: #{tpu_custom_call.1} parent=5 // pred_check
        _
      $region10: #{tpu_custom_call.1} parent=5 // pred_check_branch
        %135 = sbr.rel (%p132) target = $region12
      $region11: #{tpu_custom_call.1} parent=5 // pred_region
        %s136 = ssub.s32 %s12, 1
        // Predicated region
        $region13: #{tpu_custom_call.1} parent=11 // pred_check
          %p137 = pneg %p73
        $region14: #{tpu_custom_call.1} parent=11 // pred_check_branch
          %139 = sbr.rel (%p137) target = $region16
        $region15: #{tpu_custom_call.1} parent=11 // pred_region
          _
        $region16: #{tpu_custom_call.1} parent=11 // pred_fallthru
          _
        // Predicated region
        $region17: #{tpu_custom_call.1} parent=11 // pred_check
          %p140 = pneg %p94
        $region18: #{tpu_custom_call.1} parent=11 // pred_check_branch
          %142 = sbr.rel (%p140) target = $region20
        $region19: #{tpu_custom_call.1} parent=11 // pred_region
          _
        $region20: #{tpu_custom_call.1} parent=11 // pred_fallthru
          _
      $region12: #{tpu_custom_call.1} parent=5 // pred_fallthru
        _
      %p143 = scmp.lt.s32.totalorder %s12, 2
      // Predicated region
      $region21: #{tpu_custom_call.1} parent=5 // pred_check
        %p144 = pneg %p143
      $region22: #{tpu_custom_call.1} parent=5 // pred_check_branch
        %146 = sbr.rel (%p144) target = $region24
      $region23: #{tpu_custom_call.1} parent=5 // pred_region
        // Predicated region
        $region25: #{tpu_custom_call.1} parent=23 // pred_check
          %p147 = pneg %p46
        $region26: #{tpu_custom_call.1} parent=23 // pred_check_branch
          %149 = sbr.rel (%p147) target = $region28
        $region27: #{tpu_custom_call.1} parent=23 // pred_region
          %s150 = smul.u32 2, %s20
          %p151 = scmp.lt.s32.totalorder %s19, 1
          %s152 = scalar_select %p151, %s19, 1
          %p153 = scmp.lt.s32.totalorder %s150, 1
          %s154 = scalar_select %p153, %s150, 1
          %s155 = smul.addr %s152, 2
          %s156 = sadd.s32 %s154, %s155
          %s157 = smul.addr %s156, 4
          %s158 = scalar_lea.vmem %s0, %s157
          %s159 = smul.u32 2, %s20
        $region28: #{tpu_custom_call.1} parent=23 // pred_fallthru
          _
      $region24: #{tpu_custom_call.1} parent=5 // pred_fallthru
        _
      %p160 = scmp.le.s32.totalorder 1, %s12
      %p161 = scmp.lt.s32.totalorder %s12, 3
      %p162 = pnand %p160, %p161
      %p163 = pneg %p162
      // Predicated region
      $region29: #{tpu_custom_call.1} parent=5 // pred_check
        _
      $region30: #{tpu_custom_call.1} parent=5 // pred_check_branch
        %165 = sbr.rel (%p162) target = $region32
      $region31: #{tpu_custom_call.1} parent=5 // pred_region
        %s166 = ssub.s32 %s12, 1
        %s167 = smul.u32 2, %s22
        %p168 = scmp.lt.s32.totalorder %s21, 1
        %s169 = scalar_select %p168, %s21, 1
        %p170 = scmp.lt.s32.totalorder %s167, 1
        %s171 = scalar_select %p170, %s167, 1
        %s172 = smul.addr %s169, 2
        %s173 = sadd.s32 %s171, %s172
        %s174 = smul.addr %s173, 4
        %s175 = scalar_lea.vmem %s0, %s174
        %p176 = pneg %p52
        %p177 = pneg %p49
        %p178 = pneg %p73
        %p179 = pneg %p70
        %p180 = pneg %p94
        %p181 = pneg %p91
        %p182 = pneg %p122
        %p183 = pneg %p119
        %s184 = sand.u32 %s109, 1
        %s185 = scalar_lea.sflag [#allocation3], %s184
        %s186 = sand.u32 %s109, 1
        %s187 = smul.addr %s186, 16
        %s188 = scalar_lea.vmem [#allocation2], %s187
        %s189 = smul.u32 2, %s22
        %p190 = scmp.lt.s32.totalorder %s21, 1
        %s191 = scalar_select %p190, %s21, 1
        %p192 = scmp.lt.s32.totalorder %s189, 1
        %s193 = scalar_select %p192, %s189, 1
        %s194 = smul.addr %s191, 2
        %s195 = sadd.s32 %s193, %s194
        %s196 = smul.addr %s195, 4
        %s197 = scalar_lea.vmem %s0, %s196
        %s198 = smul.u32 2, %s22
        %s199 = smul.u32 2, %s22
        %v200 = vld [vmem:[%s197] sm:$0xff]
        %v201 = vld [vmem:[%s1] sm:$0xff]
        %v202 = vld [vmem:[%s2] sm:$0xff]
        %204 = vset.pattern.permute.xlu0 0
        %205 = vperm.xlu0 %204, %v201
        %v206 = vpop.permute.xlu0 %205
        %v209 = vlaneseq
        %v210 = vshrl.u32 %v209, 7
        %v211 = vsub.s32 0, %v210
        %v212 = vrot.slane %v200, %v211
        %v213 = vlaneseq
        %v214 = vshrl.u32 %v213, 7
        %v215 = vsub.s32 4, %v214
        %v216 = vrot.slane %v200, %v215
        %v219 = vlaneseq
        %v220 = vshrl.u32 %v219, 7
        %v221 = vsub.s32 0, %v220
        %v222 = vrot.slane %v212, %v221
        %v223 = vlaneseq
        %v224 = vshrl.u32 %v223, 7
        %v225 = vsub.s32 0, %v224
        %v226 = vrot.slane %v216, %v225
        %v227 = vmul.f32 %v206, %v222
        %v228 = vmul.f32 %v206, %v226
        %230 = vset.pattern.permute.xlu0 0
        %231 = vperm.xlu0 %230, %v202
        %v232 = vpop.permute.xlu0 %231
        %v234 = vadd.f32 %v232, %v227
        %v235 = vadd.f32 %v232, %v228
        %236 = vset.pattern.permute.xlu0 1
        %237 = vperm.xlu0 %236, %v201
        %v238 = vpop.permute.xlu0 %237
        %v240 = vlaneseq
        %v241 = vshrl.u32 %v240, 7
        %v242 = vsub.s32 1, %v241
        %v243 = vrot.slane %v200, %v242
        %v244 = vlaneseq
        %v245 = vshrl.u32 %v244, 7
        %v246 = vsub.s32 5, %v245
        %v247 = vrot.slane %v200, %v246
        %v250 = vlaneseq
        %v251 = vshrl.u32 %v250, 7
        %v252 = vsub.s32 1, %v251
        %v253 = vrot.slane %v243, %v252
        %v254 = vlaneseq
        %v255 = vshrl.u32 %v254, 7
        %v256 = vsub.s32 1, %v255
        %v257 = vrot.slane %v247, %v256
        %v258 = vmul.f32 %v238, %v253
        %v259 = vmul.f32 %v238, %v257
        %v260 = vadd.f32 %v234, %v258
        %v261 = vadd.f32 %v235, %v259
        %262 = vset.pattern.permute.xlu0 2
        %263 = vperm.xlu0 %262, %v201
        %v264 = vpop.permute.xlu0 %263
        %v266 = vlaneseq
        %v267 = vshrl.u32 %v266, 7
        %v268 = vsub.s32 2, %v267
        %v269 = vrot.slane %v200, %v268
        %v270 = vlaneseq
        %v271 = vshrl.u32 %v270, 7
        %v272 = vsub.s32 6, %v271
        %v273 = vrot.slane %v200, %v272
        %v276 = vlaneseq
        %v277 = vshrl.u32 %v276, 7
        %v278 = vsub.s32 2, %v277
        %v279 = vrot.slane %v269, %v278
        %v280 = vlaneseq
        %v281 = vshrl.u32 %v280, 7
        %v282 = vsub.s32 2, %v281
        %v283 = vrot.slane %v273, %v282
        %v284 = vmul.f32 %v264, %v279
        %v285 = vmul.f32 %v264, %v283
        %v286 = vadd.f32 %v260, %v284
        %v287 = vadd.f32 %v261, %v285
        %288 = vset.pattern.permute.xlu0 3
        %289 = vperm.xlu0 %288, %v201
        %v290 = vpop.permute.xlu0 %289
        %v292 = vlaneseq
        %v293 = vshrl.u32 %v292, 7
        %v294 = vsub.s32 3, %v293
        %v295 = vrot.slane %v200, %v294
        %v296 = vlaneseq
        %v297 = vshrl.u32 %v296, 7
        %v298 = vsub.s32 7, %v297
        %v299 = vrot.slane %v200, %v298
        %v302 = vlaneseq
        %v303 = vshrl.u32 %v302, 7
        %v304 = vsub.s32 3, %v303
        %v305 = vrot.slane %v295, %v304
        %v306 = vlaneseq
        %v307 = vshrl.u32 %v306, 7
        %v308 = vsub.s32 3, %v307
        %v309 = vrot.slane %v299, %v308
        %v310 = vmul.f32 %v290, %v305
        %v311 = vmul.f32 %v290, %v309
        %v312 = vadd.f32 %v286, %v310
        %v313 = vadd.f32 %v287, %v311
        %v314 = vadd.f32 %v312, 3.0
        %v315 = vadd.f32 %v313, 3.0
        %v316 = vmax.f32 %v314, 0.0
        %v317 = vmax.f32 %v315, 0.0
        %v318 = vmin.f32 %v316, 6.0
        %v319 = vmin.f32 %v317, 6.0
        %v320 = vmul.f32 %v312, %v318
        %v321 = vmul.f32 %v313, %v319
        %v322 = vmul.f32 %v320, 0.16666667
        %v323 = vmul.f32 %v321, 0.16666667
        %324 = vst [vmem:[%s188] sm:$0xff] %v322
        %325 = vst [vmem:[%s188 + $0x8] sm:$0xff] %v323
        %s326 = sand.u32 %s109, 1
        %s327 = scalar_lea.sflag [#allocation3], %s326
        %s328 = sand.u32 %s109, 1
        %s329 = smul.addr %s328, 16
        %s330 = scalar_lea.vmem [#allocation2], %s329
        // Predicated region
        $region33: #{tpu_custom_call.1} parent=31 // pred_check
          %p331 = pneg %p119
        $region34: #{tpu_custom_call.1} parent=31 // pred_check_branch
          %333 = sbr.rel (%p331) target = $region36
        $region35: #{tpu_custom_call.1} parent=31 // pred_region
          %s334 = smul.u32 2, %s22
          %s336 = ssub.s32 256, 256
          %337 = vsyncadd %s327, %s336
          %s338 = smul.addr %s21, 2
          %s339 = sadd.s32 %s334, %s338
          %s340 = smul.addr %s339, 128
          %s341 = scalar_lea.hbm %s3, %s340
          %s343 = sshll.u32 %s330, 4
          %s344 = int_to_ptr.vmem [resolvable:$true] %s343
          %346 = dma.vmem_to_hbm [thread:$0]  %s344, 256, %s341, %s327
        $region36: #{tpu_custom_call.1} parent=31 // pred_fallthru
          _
      $region32: #{tpu_custom_call.1} parent=5 // pred_fallthru
        _
      %p347 = scmp.le.s32.totalorder 2, %s12
      // Predicated region
      $region37: #{tpu_custom_call.1} parent=5 // pred_check
        %p348 = pneg %p347
      $region38: #{tpu_custom_call.1} parent=5 // pred_check_branch
        %350 = sbr.rel (%p348) target = $region40
      $region39: #{tpu_custom_call.1} parent=5 // pred_region
        %s351 = ssub.s32 %s12, 2
        // Predicated region
        $region41: #{tpu_custom_call.1} parent=39 // pred_check
          %p352 = pneg %p125
        $region42: #{tpu_custom_call.1} parent=39 // pred_check_branch
          %354 = sbr.rel (%p352) target = $region44
        $region43: #{tpu_custom_call.1} parent=39 // pred_region
          %s355 = sand.u32 %s110, 1
          %s356 = scalar_lea.sflag [#allocation3], %s355
          %s357 = sand.u32 %s110, 1
          %s358 = smul.addr %s357, 16
          %s359 = scalar_lea.vmem [#allocation2], %s358
          %360 = dma.done %s356, 256
        $region44: #{tpu_custom_call.1} parent=39 // pred_fallthru
          _
      $region40: #{tpu_custom_call.1} parent=5 // pred_fallthru
        _
    $region6: #{tpu_custom_call.1} parent=1 // loop_footer
      %s16 = sadd.s32 1, %s12
    $region7: #{tpu_custom_call.1} parent=1 // loop_footer_branch
      %11 = sbr.rel target = $region3
    $region8: #{tpu_custom_call.1} parent=1 // loop_exit
      _
    %361 = vsyncpa [#allocation3], 1
    %s362 = scalar_lea.sflag [#allocation3], 1
    %363 = vsyncpa %s362, 1

</llo_original>
